<compile_context>
chip_gen: v5e
topology: v5e:2x2
jax: 0.10.0
libtpu: 0.0.40
codegen_flags: <defaults>
</compile_context>

<pallas_src>
import functools

import jax
import jax.numpy as jnp
from jax.experimental import pallas as pl
from jax.experimental.pallas import tpu as pltpu


def _round_up(x, m):
    return ((x + m - 1) // m) * m


# ---------------------------------------------------------------------------
# Kernel
# ---------------------------------------------------------------------------
def _critic_kernel(xu_ref,
                   w1_ref, b1_ref,      # fused layer-1 weight/bias (both heads)
                   w12_ref, b12_ref,    # head-1 layer-2
                   w22_ref, b22_ref,    # head-2 layer-2
                   w3_ref, b3_ref,      # fused block-diagonal output projection
                   q_ref,
                   *, hidden1, hidden2):
    del hidden2  # layout is symmetric; only the H1 split point is needed.

    # MXU operands in bf16 (f32 accumulation); bias / ReLU on the VPU in f32.
    xu = xu_ref[...].astype(jnp.bfloat16)

    # Fused layer 1: (TB, IN_PAD) @ (IN_PAD, 2*H1) -> (TB, 2*H1).
    h1 = jnp.dot(xu, w1_ref[...], preferred_element_type=jnp.float32)
    h1 = jnp.maximum(h1 + b1_ref[...], 0.0)

    # Layer 2, per head (slice at the 128-aligned lane boundary H1).
    x1 = h1[:, :hidden1].astype(jnp.bfloat16)
    x2 = h1[:, hidden1:].astype(jnp.bfloat16)
    h21 = jnp.maximum(
        jnp.dot(x1, w12_ref[...], preferred_element_type=jnp.float32) + b12_ref[...], 0.0)
    h22 = jnp.maximum(
        jnp.dot(x2, w22_ref[...], preferred_element_type=jnp.float32) + b22_ref[...], 0.0)

    # Fused output projection: block-diagonal (2*H2, 2) -> one MXU pass, one (TB, 2) store.
    h2 = jnp.concatenate([h21, h22], axis=-1).astype(jnp.bfloat16)
    q_ref[...] = jnp.dot(h2, w3_ref[...], preferred_element_type=jnp.float32) + b3_ref[...]


# ---------------------------------------------------------------------------
# Parameters
# ---------------------------------------------------------------------------
def init_critic_params(key, state_size=33, action_size=4, hidden1=256, hidden2=256):
    """PyTorch-equivalent params: orthogonal (gain=1.0) weights, 0.1 biases.
    Stored as (in, out) f32 weights (transpose of PyTorch layout) and (1, out) biases."""
    ortho = jax.nn.initializers.orthogonal(scale=1.0)
    keys = jax.random.split(key, 6)
    dims = [
        (state_size + action_size, hidden1),   # fc1_1
        (hidden1, hidden2),                    # fc1_2
        (hidden2, 1),                          # fc1_3
        (state_size + action_size, hidden1),   # fc2_1
        (hidden1, hidden2),                    # fc2_2
        (hidden2, 1),                          # fc2_3
    ]
    params = []
    for k, (din, dout) in zip(keys, dims):
        w = ortho(k, (dout, din), jnp.float32).T          # (in, out)
        b = jnp.full((1, dout), 0.1, dtype=jnp.float32)
        params += [w, b]
    return tuple(params)


def pack_kernel_params(params, state_size=33, action_size=4, hidden1=256, hidden2=256):
    """Fuse / pad per-layer params into the kernel layout (bf16 weights, f32 biases)."""
    (w11, b11, w12, b12, w13, b13,
     w21, b21, w22, b22, w23, b23) = params
    in_dim = state_size + action_size
    in_pad = _round_up(in_dim, 8)

    # Fused layer-1 weight: (in_pad, 2*H1); zero rows for the padded features.
    w1 = jnp.zeros((in_pad, 2 * hidden1), jnp.float32)
    w1 = w1.at[:in_dim, :hidden1].set(w11).at[:in_dim, hidden1:].set(w21)
    b1 = jnp.concatenate([b11, b21], axis=-1)

    # Fused block-diagonal output projection: (2*H2, 2).
    w3 = jnp.zeros((2 * hidden2, 2), jnp.float32)
    w3 = w3.at[:hidden2, 0:1].set(w13).at[hidden2:, 1:2].set(w23)
    b3 = jnp.concatenate([b13, b23], axis=-1)

    bf16 = jnp.bfloat16
    return (w1.astype(bf16), b1,
            w12.astype(bf16), b12,
            w22.astype(bf16), b22,
            w3.astype(bf16), b3)


# ---------------------------------------------------------------------------
# Forward pass
# ---------------------------------------------------------------------------
def critic_forward(state, action, kernel_params,
                   state_size=33, action_size=4, hidden1=256, hidden2=256,
                   tile_b=256):
    # Glue (concat, padding, slicing) stays in plain JAX.
    xu = jnp.concatenate([state, action], axis=-1).astype(jnp.float32)
    batch = xu.shape[0]
    in_dim = xu.shape[1]
    in_pad = _round_up(in_dim, 8)

    # Batch tile: multiple of 8 (f32 sublane), capped at `tile_b` so big replay-buffer
    # batches pipeline through VMEM instead of being fully resident (v7x VMEM = 64 MiB).
    tb = min(_round_up(tile_b, 8), _round_up(batch, 8))
    padded_batch = _round_up(batch, tb)
    xu = jnp.pad(xu, ((0, padded_batch - batch), (0, in_pad - in_dim)))

    w1, b1, w12, b12, w22, b22, w3, b3 = kernel_params

    def pinned(a):
        return pl.BlockSpec(a.shape, lambda i: (0, 0))

    flops = 2 * padded_batch * (in_pad * 2 * hidden1
                                + 2 * hidden1 * hidden2
                                + 2 * hidden2 * 2)
    bytes_accessed = int(
        sum(int(a.size) * a.dtype.itemsize for a in (xu,) + tuple(kernel_params))
        + padded_batch * 2 * 4)

    q = pl.pallas_call(
        functools.partial(_critic_kernel, hidden1=hidden1, hidden2=hidden2),
        out_shape=jax.ShapeDtypeStruct((padded_batch, 2), jnp.float32),
        grid=(padded_batch // tb,),
        in_specs=[
            pl.BlockSpec((tb, in_pad), lambda i: (i, 0)),   # xu tiles over batch
            pinned(w1), pinned(b1),
            pinned(w12), pinned(b12),
            pinned(w22), pinned(b22),
            pinned(w3), pinned(b3),
        ],
        out_specs=pl.BlockSpec((tb, 2), lambda i: (i, 0)),
        compiler_params=pltpu.CompilerParams(
            dimension_semantics=("parallel",)),
        cost_estimate=pl.CostEstimate(
            flops=flops, transcendentals=0, bytes_accessed=bytes_accessed),
    )(xu, w1, b1, w12, b12, w22, b22, w3, b3)

    q1 = q[:batch, 0:1]
    q2 = q[:batch, 1:2]
    return q1, q2


# ---------------------------------------------------------------------------
# Pure-JAX f32 reference (mirrors the PyTorch forward exactly)
# ---------------------------------------------------------------------------
def critic_reference(state, action, params):
    xu = jnp.concatenate([state, action], axis=-1).astype(jnp.float32)
    (w11, b11, w12, b12, w13, b13,
     w21, b21, w22, b22, w23, b23) = params
    x1 = jax.nn.relu(xu @ w11 + b11)
    x1 = jax.nn.relu(x1 @ w12 + b12)
    q1 = x1 @ w13 + b13
    x2 = jax.nn.relu(xu @ w21 + b21)
    x2 = jax.nn.relu(x2 @ w22 + b22)
    q2 = x2 @ w23 + b23
    return q1, q2


if __name__ == "__main__":
    key = jax.random.PRNGKey(0)
    k_params, k_state, k_action = jax.random.split(key, 3)

    state_size, action_size, hidden1, hidden2 = 33, 4, 256, 256
    batch = 2

    params = init_critic_params(k_params, state_size, action_size, hidden1, hidden2)
    kernel_params = pack_kernel_params(params, state_size, action_size, hidden1, hidden2)

    state = jax.random.normal(k_state, (batch, state_size), dtype=jnp.float32)
    action = jax.random.normal(k_action, (batch, action_size), dtype=jnp.float32)

    q1, q2 = critic_forward(state, action, kernel_params,
                            state_size=state_size, action_size=action_size,
                            hidden1=hidden1, hidden2=hidden2)
    jax.block_until_ready((q1, q2))

    assert q1.shape == (batch, 1) and q2.shape == (batch, 1)

    # Validate the bf16-MXU path against the f32 reference (loose tolerance for bf16 drift).
    r1, r2 = critic_reference(state, action, params)
    assert jnp.allclose(q1, r1, rtol=1e-1, atol=1e-1), (q1, r1)
    assert jnp.allclose(q2, r2, rtol=1e-1, atol=1e-1), (q2, r2)

    print("KERNEL_OK")
</pallas_src>

<mosaic_0001>
module attributes {stable_mosaic.version = 11 : i64} {
  func.func @_critic_kernel(%arg0: i32, %arg1: memref<8x40xf32, #tpu.memory_space<vmem>>, %arg2: memref<40x512xbf16, #tpu.memory_space<vmem>>, %arg3: memref<1x512xf32, #tpu.memory_space<vmem>>, %arg4: memref<256x256xbf16, #tpu.memory_space<vmem>>, %arg5: memref<1x256xf32, #tpu.memory_space<vmem>>, %arg6: memref<256x256xbf16, #tpu.memory_space<vmem>>, %arg7: memref<1x256xf32, #tpu.memory_space<vmem>>, %arg8: memref<512x2xbf16, #tpu.memory_space<vmem>>, %arg9: memref<1x2xf32, #tpu.memory_space<vmem>>, %arg10: memref<8x2xf32, #tpu.memory_space<vmem>>) attributes {dimension_semantics = [#tpu.dimension_semantics<parallel>], iteration_bounds = array<i64: 1>, scalar_prefetch = 0 : i64, scratch_operands = 0 : i64, tpu.core_type = #tpu.core_type<tc>, window_params = [{transform_indices = @transform_0, window_bounds = array<i64: 8, 40>}, {pipeline_mode = #tpu.pipeline_mode<synchronous>, transform_indices = @transform_1, window_bounds = array<i64: 40, 512>}, {pipeline_mode = #tpu.pipeline_mode<synchronous>, transform_indices = @transform_2, window_bounds = array<i64: 1, 512>}, {pipeline_mode = #tpu.pipeline_mode<synchronous>, transform_indices = @transform_3, window_bounds = array<i64: 256, 256>}, {pipeline_mode = #tpu.pipeline_mode<synchronous>, transform_indices = @transform_4, window_bounds = array<i64: 1, 256>}, {pipeline_mode = #tpu.pipeline_mode<synchronous>, transform_indices = @transform_5, window_bounds = array<i64: 256, 256>}, {pipeline_mode = #tpu.pipeline_mode<synchronous>, transform_indices = @transform_6, window_bounds = array<i64: 1, 256>}, {pipeline_mode = #tpu.pipeline_mode<synchronous>, transform_indices = @transform_7, window_bounds = array<i64: 512, 2>}, {pipeline_mode = #tpu.pipeline_mode<synchronous>, transform_indices = @transform_8, window_bounds = array<i64: 1, 2>}, {transform_indices = @transform_9, window_bounds = array<i64: 8, 2>}]} {
    %c0 = arith.constant 0 : index
    %c0_0 = arith.constant 0 : index
    %0 = vector.load %arg1[%c0, %c0_0] : memref<8x40xf32, #tpu.memory_space<vmem>>, vector<8x40xf32>
    %1 = arith.truncf %0 : vector<8x40xf32> to vector<8x40xbf16>
    %c0_1 = arith.constant 0 : index
    %c0_2 = arith.constant 0 : index
    %2 = vector.load %arg2[%c0_1, %c0_2] : memref<40x512xbf16, #tpu.memory_space<vmem>>, vector<40x512xbf16>
    %cst = arith.constant dense<0.000000e+00> : vector<8x512xf32>
    %3 = tpu.matmul %1, %2, %cst {dimension_numbers = #tpu.dot_dimension_numbers<[1], [0], [0], [1], [0, 0, 1, 1], [], []>} : vector<8x40xbf16>, vector<40x512xbf16>, vector<8x512xf32> -> vector<8x512xf32>
    %c0_3 = arith.constant 0 : index
    %c0_4 = arith.constant 0 : index
    %4 = vector.load %arg3[%c0_3, %c0_4] : memref<1x512xf32, #tpu.memory_space<vmem>>, vector<1x512xf32>
    %5 = vector.broadcast %4 : vector<1x512xf32> to vector<8x512xf32>
    %6 = arith.addf %3, %5 : vector<8x512xf32>
    %cst_5 = arith.constant 0.000000e+00 : f32
    %7 = vector.broadcast %cst_5 : f32 to vector<8x512xf32>
    %8 = arith.maximumf %6, %7 : vector<8x512xf32>
    %9 = vector.extract_strided_slice %8 {offsets = [0, 0], sizes = [8, 256], strides = [1, 1]} : vector<8x512xf32> to vector<8x256xf32>
    %10 = arith.truncf %9 : vector<8x256xf32> to vector<8x256xbf16>
    %11 = vector.extract_strided_slice %8 {offsets = [0, 256], sizes = [8, 256], strides = [1, 1]} : vector<8x512xf32> to vector<8x256xf32>
    %12 = arith.truncf %11 : vector<8x256xf32> to vector<8x256xbf16>
    %c0_6 = arith.constant 0 : index
    %c0_7 = arith.constant 0 : index
    %13 = vector.load %arg4[%c0_6, %c0_7] : memref<256x256xbf16, #tpu.memory_space<vmem>>, vector<256x256xbf16>
    %cst_8 = arith.constant dense<0.000000e+00> : vector<8x256xf32>
    %14 = tpu.matmul %10, %13, %cst_8 {dimension_numbers = #tpu.dot_dimension_numbers<[1], [0], [0], [1], [0, 0, 1, 1], [], []>} : vector<8x256xbf16>, vector<256x256xbf16>, vector<8x256xf32> -> vector<8x256xf32>
    %c0_9 = arith.constant 0 : index
    %c0_10 = arith.constant 0 : index
    %15 = vector.load %arg5[%c0_9, %c0_10] : memref<1x256xf32, #tpu.memory_space<vmem>>, vector<1x256xf32>
    %16 = vector.broadcast %15 : vector<1x256xf32> to vector<8x256xf32>
    %17 = arith.addf %14, %16 : vector<8x256xf32>
    %cst_11 = arith.constant 0.000000e+00 : f32
    %18 = vector.broadcast %cst_11 : f32 to vector<8x256xf32>
    %19 = arith.maximumf %17, %18 : vector<8x256xf32>
    %c0_12 = arith.constant 0 : index
    %c0_13 = arith.constant 0 : index
    %20 = vector.load %arg6[%c0_12, %c0_13] : memref<256x256xbf16, #tpu.memory_space<vmem>>, vector<256x256xbf16>
    %cst_14 = arith.constant dense<0.000000e+00> : vector<8x256xf32>
    %21 = tpu.matmul %12, %20, %cst_14 {dimension_numbers = #tpu.dot_dimension_numbers<[1], [0], [0], [1], [0, 0, 1, 1], [], []>} : vector<8x256xbf16>, vector<256x256xbf16>, vector<8x256xf32> -> vector<8x256xf32>
    %c0_15 = arith.constant 0 : index
    %c0_16 = arith.constant 0 : index
    %22 = vector.load %arg7[%c0_15, %c0_16] : memref<1x256xf32, #tpu.memory_space<vmem>>, vector<1x256xf32>
    %23 = vector.broadcast %22 : vector<1x256xf32> to vector<8x256xf32>
    %24 = arith.addf %21, %23 : vector<8x256xf32>
    %cst_17 = arith.constant 0.000000e+00 : f32
    %25 = vector.broadcast %cst_17 : f32 to vector<8x256xf32>
    %26 = arith.maximumf %24, %25 : vector<8x256xf32>
    %27 = tpu.concatenate %19, %26 in 1 : vector<8x256xf32>, vector<8x256xf32> -> vector<8x512xf32>
    %28 = arith.truncf %27 : vector<8x512xf32> to vector<8x512xbf16>
    %c0_18 = arith.constant 0 : index
    %c0_19 = arith.constant 0 : index
    %29 = vector.load %arg8[%c0_18, %c0_19] : memref<512x2xbf16, #tpu.memory_space<vmem>>, vector<512x2xbf16>
    %cst_20 = arith.constant dense<0.000000e+00> : vector<8x2xf32>
    %30 = tpu.matmul %28, %29, %cst_20 {dimension_numbers = #tpu.dot_dimension_numbers<[1], [0], [0], [1], [0, 0, 1, 1], [], []>} : vector<8x512xbf16>, vector<512x2xbf16>, vector<8x2xf32> -> vector<8x2xf32>
    %c0_21 = arith.constant 0 : index
    %c0_22 = arith.constant 0 : index
    %31 = vector.load %arg9[%c0_21, %c0_22] : memref<1x2xf32, #tpu.memory_space<vmem>>, vector<1x2xf32>
    %32 = vector.broadcast %31 : vector<1x2xf32> to vector<8x2xf32>
    %33 = arith.addf %30, %32 : vector<8x2xf32>
    %c0_23 = arith.constant 0 : index
    %c0_24 = arith.constant 0 : index
    %34 = vector.load %arg10[%c0_23, %c0_24] : memref<8x2xf32, #tpu.memory_space<vmem>>, vector<8x2xf32>
    tpu.vector_store %arg10[%c0_23, %c0_24], %33 {strides = array<i32>} : memref<8x2xf32, #tpu.memory_space<vmem>>, vector<8x2xf32>,
    return
  }
  func.func @transform_0(%arg0: i32) -> (i32, i32) {
    %c0_i32 = arith.constant 0 : i32
    %c0_i32_0 = arith.constant 0 : i32
    return %arg0, %c0_i32 : i32, i32
  }
  func.func @transform_1(%arg0: i32) -> (i32, i32) {
    %c0_i32 = arith.constant 0 : i32
    %c0_i32_0 = arith.constant 0 : i32
    %c0_i32_1 = arith.constant 0 : i32
    return %c0_i32, %c0_i32_0 : i32, i32
  }
  func.func @transform_2(%arg0: i32) -> (i32, i32) {
    %c0_i32 = arith.constant 0 : i32
    %c0_i32_0 = arith.constant 0 : i32
    %c0_i32_1 = arith.constant 0 : i32
    return %c0_i32, %c0_i32_0 : i32, i32
  }
  func.func @transform_3(%arg0: i32) -> (i32, i32) {
    %c0_i32 = arith.constant 0 : i32
    %c0_i32_0 = arith.constant 0 : i32
    %c0_i32_1 = arith.constant 0 : i32
    return %c0_i32, %c0_i32_0 : i32, i32
  }
  func.func @transform_4(%arg0: i32) -> (i32, i32) {
    %c0_i32 = arith.constant 0 : i32
    %c0_i32_0 = arith.constant 0 : i32
    %c0_i32_1 = arith.constant 0 : i32
    return %c0_i32, %c0_i32_0 : i32, i32
  }
  func.func @transform_5(%arg0: i32) -> (i32, i32) {
    %c0_i32 = arith.constant 0 : i32
    %c0_i32_0 = arith.constant 0 : i32
    %c0_i32_1 = arith.constant 0 : i32
    return %c0_i32, %c0_i32_0 : i32, i32
  }
  func.func @transform_6(%arg0: i32) -> (i32, i32) {
    %c0_i32 = arith.constant 0 : i32
    %c0_i32_0 = arith.constant 0 : i32
    %c0_i32_1 = arith.constant 0 : i32
    return %c0_i32, %c0_i32_0 : i32, i32
  }
  func.func @transform_7(%arg0: i32) -> (i32, i32) {
    %c0_i32 = arith.constant 0 : i32
    %c0_i32_0 = arith.constant 0 : i32
    %c0_i32_1 = arith.constant 0 : i32
    return %c0_i32, %c0_i32_0 : i32, i32
  }
  func.func @transform_8(%arg0: i32) -> (i32, i32) {
    %c0_i32 = arith.constant 0 : i32
    %c0_i32_0 = arith.constant 0 : i32
    %c0_i32_1 = arith.constant 0 : i32
    return %c0_i32, %c0_i32_0 : i32, i32
  }
  func.func @transform_9(%arg0: i32) -> (i32, i32) {
    %c0_i32 = arith.constant 0 : i32
    %c0_i32_0 = arith.constant 0 : i32
    return %arg0, %c0_i32 : i32, i32
  }
}

</mosaic_0001>

<llo_original>
// kernel: tpu_custom_call.1
$region0: #{tpu_custom_call.1}
  #allocation0 [shape = 'u32[]', space=smem, size = 0x4, offset = 0x4, fixed_abs, tag = 'smem constant byte address 0x4 - core index']
  #allocation1 [shape = 'u32[72,128]{1,0:T(1,128)}', space=vmem, size = 0x9000, scoped, tag = 'internal scratch']
  %s0 = inlined_call_operand.hbm [shape: f32[8,40], index: 0, kind: input, shape index: {}]
  %s1 = inlined_call_operand.hbm [shape: bf16[40,512], index: 1, kind: input, shape index: {}]
  %s2 = inlined_call_operand.vmem [shape: f32[1,512], index: 2, kind: input, shape index: {}]
  %s3 = inlined_call_operand.vmem [shape: bf16[256,256], index: 3, kind: input, shape index: {}]
  %s4 = inlined_call_operand.vmem [shape: f32[1,256], index: 4, kind: input, shape index: {}]
  %s5 = inlined_call_operand.hbm [shape: bf16[256,256], index: 5, kind: input, shape index: {}]
  %s6 = inlined_call_operand.hbm [shape: f32[1,256], index: 6, kind: input, shape index: {}]
  %s7 = inlined_call_operand.vmem [shape: bf16[512,2], index: 7, kind: input, shape index: {}]
  %s8 = inlined_call_operand.hbm [shape: f32[1,2], index: 8, kind: input, shape index: {}]
  %s9 = inlined_call_operand.vmem [shape: f32[8,2], index: 9, kind: output, shape index: {}]
  %s10 = sld [smem:[#allocation0]]
  $region66: #{tpu_custom_call.1} parent=0
    _
  %s12 = ssub.s32 1, %s10
  %s13 = scalar_select 0, %s12, %s10
  $region1: #{tpu_custom_call.1} parent=0
    #allocation2 [shape = 'u8[4096]{0}', space=vmem, size = 0x1000, scoped, tag = 'input window, operand 0, single buffered']
    #allocation3 [shape = 's32[1]{0}', space=sflag, size = 0x4, scoped, tag = 'scoped memory for tpu_custom_call.1']
    #allocation4 [shape = 'u8[40960]{0}', space=vmem, size = 0xa000, scoped, tag = 'input window, operand 1, single buffered']
    #allocation5 [shape = 's32[1]{0}', space=sflag, size = 0x4, scoped, tag = 'scoped memory for tpu_custom_call.1']
    #allocation6 [shape = 'u8[131072]{0}', space=vmem, size = 0x20000, scoped, tag = 'input window, operand 5, single buffered']
    #allocation7 [shape = 'u8[1024]{0}', space=vmem, size = 0x400, scoped, tag = 'input window, operand 6, single buffered']
    #allocation8 [shape = 's32[1]{0}', space=sflag, size = 0x4, scoped, tag = 'scoped memory for tpu_custom_call.1']
    #allocation9 [shape = 'u8[512]{0}', space=vmem, size = 0x400, scoped, tag = 'input window, operand 8, single buffered']
    %14 = vsyncpa [#allocation3], 0
    %15 = vsyncpa [#allocation5], 0
    %16 = vsyncpa [#allocation8], 0
    // Predicated region
    $region2: #{tpu_custom_call.1} parent=1 // pred_check
      _
    $region3: #{tpu_custom_call.1} parent=1 // pred_check_branch
      %18 = sbr.rel (0) target = $region5
    $region4: #{tpu_custom_call.1} parent=1 // pred_region
      %20 = vsyncadd [#allocation3], 0
      %s22 = sshll.u32 %s0, 4
      %s23 = int_to_ptr.hbm [resolvable:$true] %s22
      %s24 = sshll.u32 [#allocation2], 4
      %s25 = int_to_ptr.vmem [resolvable:$true] %s24
      %27 = dma.hbm_to_vmem [thread:$0]  %s23, 128, %s25, [#allocation3]
    $region5: #{tpu_custom_call.1} parent=1 // pred_fallthru
      _
    // Predicated region
    $region6: #{tpu_custom_call.1} parent=1 // pred_check
      _
    $region7: #{tpu_custom_call.1} parent=1 // pred_check_branch
      %29 = sbr.rel (0) target = $region9
    $region8: #{tpu_custom_call.1} parent=1 // pred_region
      %31 = vsyncadd [#allocation5], 0
      %s32 = sshll.u32 %s1, 4
      %s33 = int_to_ptr.hbm [resolvable:$true] %s32
      %s34 = sshll.u32 [#allocation4], 4
      %s35 = int_to_ptr.vmem [resolvable:$true] %s34
      %40 = dma.hbm_to_vmem [thread:$0]  %s33, 1280, %s35, [#allocation5], 256, 256, 16
    $region9: #{tpu_custom_call.1} parent=1 // pred_fallthru
      _
    // Predicated region
    $region10: #{tpu_custom_call.1} parent=1 // pred_check
      _
    $region11: #{tpu_custom_call.1} parent=1 // pred_check_branch
      %42 = sbr.rel (0) target = $region13
    $region12: #{tpu_custom_call.1} parent=1 // pred_region
      _
    $region13: #{tpu_custom_call.1} parent=1 // pred_fallthru
      _
    // Predicated region
    $region14: #{tpu_custom_call.1} parent=1 // pred_check
      _
    $region15: #{tpu_custom_call.1} parent=1 // pred_check_branch
      %44 = sbr.rel (0) target = $region17
    $region16: #{tpu_custom_call.1} parent=1 // pred_region
      _
    $region17: #{tpu_custom_call.1} parent=1 // pred_fallthru
      _
    // Predicated region
    $region18: #{tpu_custom_call.1} parent=1 // pred_check
      _
    $region19: #{tpu_custom_call.1} parent=1 // pred_check_branch
      %46 = sbr.rel (0) target = $region21
    $region20: #{tpu_custom_call.1} parent=1 // pred_region
      _
    $region21: #{tpu_custom_call.1} parent=1 // pred_fallthru
      _
    // Predicated region
    $region22: #{tpu_custom_call.1} parent=1 // pred_check
      _
    $region23: #{tpu_custom_call.1} parent=1 // pred_check_branch
      %48 = sbr.rel (0) target = $region25
    $region24: #{tpu_custom_call.1} parent=1 // pred_region
      %50 = vsyncadd [#allocation5], 0
      %s51 = sshll.u32 %s5, 4
      %s52 = int_to_ptr.hbm [resolvable:$true] %s51
      %s53 = sshll.u32 [#allocation6], 4
      %s54 = int_to_ptr.vmem [resolvable:$true] %s53
      %59 = dma.hbm_to_vmem [thread:$0]  %s52, 4096, %s54, [#allocation5], 128, 128, 8
    $region25: #{tpu_custom_call.1} parent=1 // pred_fallthru
      _
    // Predicated region
    $region26: #{tpu_custom_call.1} parent=1 // pred_check
      _
    $region27: #{tpu_custom_call.1} parent=1 // pred_check_branch
      %61 = sbr.rel (0) target = $region29
    $region28: #{tpu_custom_call.1} parent=1 // pred_region
      %63 = vsyncadd [#allocation8], 0
      %s65 = sshll.u32 %s6, 4
      %s66 = int_to_ptr.hbm [resolvable:$true] %s65
      %s67 = sshll.u32 [#allocation7], 4
      %s68 = int_to_ptr.vmem [resolvable:$true] %s67
      %70 = dma.hbm_to_vmem [thread:$0]  %s66, 32, %s68, [#allocation8]
    $region29: #{tpu_custom_call.1} parent=1 // pred_fallthru
      _
    // Predicated region
    $region30: #{tpu_custom_call.1} parent=1 // pred_check
      _
    $region31: #{tpu_custom_call.1} parent=1 // pred_check_branch
      %72 = sbr.rel (0) target = $region33
    $region32: #{tpu_custom_call.1} parent=1 // pred_region
      _
    $region33: #{tpu_custom_call.1} parent=1 // pred_fallthru
      _
    // Predicated region
    $region34: #{tpu_custom_call.1} parent=1 // pred_check
      _
    $region35: #{tpu_custom_call.1} parent=1 // pred_check_branch
      %74 = sbr.rel (0) target = $region37
    $region36: #{tpu_custom_call.1} parent=1 // pred_region
      %76 = vsyncadd [#allocation8], 0
      %s78 = sshll.u32 %s8, 4
      %s79 = int_to_ptr.hbm [resolvable:$true] %s78
      %s80 = sshll.u32 [#allocation9], 4
      %s81 = int_to_ptr.vmem [resolvable:$true] %s80
      %83 = dma.hbm_to_vmem [thread:$0]  %s79, 16, %s81, [#allocation8]
    $region37: #{tpu_custom_call.1} parent=1 // pred_fallthru
      _
    // Predicated region
    $region38: #{tpu_custom_call.1} parent=1 // pred_check
      _
    $region39: #{tpu_custom_call.1} parent=1 // pred_check_branch
      %85 = sbr.rel (0) target = $region41
    $region40: #{tpu_custom_call.1} parent=1 // pred_region
      %87 = dma.done [#allocation3], 128
    $region41: #{tpu_custom_call.1} parent=1 // pred_fallthru
      _
    // Predicated region
    $region42: #{tpu_custom_call.1} parent=1 // pred_check
      _
    $region43: #{tpu_custom_call.1} parent=1 // pred_check_branch
      %89 = sbr.rel (0) target = $region45
    $region44: #{tpu_custom_call.1} parent=1 // pred_region
      %91 = dma.done [#allocation5], 1280
    $region45: #{tpu_custom_call.1} parent=1 // pred_fallthru
      _
    // Predicated region
    $region46: #{tpu_custom_call.1} parent=1 // pred_check
      _
    $region47: #{tpu_custom_call.1} parent=1 // pred_check_branch
      %93 = sbr.rel (0) target = $region49
    $region48: #{tpu_custom_call.1} parent=1 // pred_region
      %95 = dma.done [#allocation5], 4096
    $region49: #{tpu_custom_call.1} parent=1 // pred_fallthru
      _
    // Predicated region
    $region50: #{tpu_custom_call.1} parent=1 // pred_check
      _
    $region51: #{tpu_custom_call.1} parent=1 // pred_check_branch
      %97 = sbr.rel (0) target = $region53
    $region52: #{tpu_custom_call.1} parent=1 // pred_region
      %99 = dma.done [#allocation8], 32
    $region53: #{tpu_custom_call.1} parent=1 // pred_fallthru
      _
    // Predicated region
    $region54: #{tpu_custom_call.1} parent=1 // pred_check
      _
    $region55: #{tpu_custom_call.1} parent=1 // pred_check_branch
      %101 = sbr.rel (0) target = $region57
    $region56: #{tpu_custom_call.1} parent=1 // pred_region
      %103 = dma.done [#allocation8], 16
    $region57: #{tpu_custom_call.1} parent=1 // pred_fallthru
      _
    %v105 = vld [vmem:[#allocation2] sm:$0xff]
    %v106 = vpack.c.bf16 %v105, %v105
    %v107 = vld [vmem:[#allocation4] sm:$0xff]
    %v108 = vld [vmem:[#allocation4 + $0x8] sm:$0xff]
    %v109 = vld [vmem:[#allocation4 + $0x10] sm:$0xff]
    %v110 = vld [vmem:[#allocation4 + $0x18] sm:$0xff]
    %v111 = vld [vmem:[#allocation4 + $0x20] sm:$0xff]
    %v112 = vld [vmem:[#allocation4 + $0x28] sm:$0xff]
    %v113 = vld [vmem:[#allocation4 + $0x30] sm:$0xff]
    %v114 = vld [vmem:[#allocation4 + $0x38] sm:$0xff]
    %v115 = vld [vmem:[#allocation4 + $0x40] sm:$0xff]
    %v116 = vld [vmem:[#allocation4 + $0x48] sm:$0xff]
    %v117 = vld [vmem:[%s2] sm:$0xf]
    %v119 = vperm.slane %v117, 0
    %v120 = vperm.slane %v117, 1
    %v121 = vperm.slane %v117, 2
    %v122 = vperm.slane %v117, 3
    %v137 = vunpack.c.l.b16 %v107
    %v138 = vunpack.c.h.b16 %v107
    %v139 = vunpack.c.l.b16 %v108
    %v140 = vunpack.c.h.b16 %v108
    %v141 = vunpack.c.l.b16 %v109
    %v142 = vunpack.c.h.b16 %v109
    %v143 = vunpack.c.l.b16 %v110
    %v144 = vunpack.c.h.b16 %v110
    %v145 = vunpack.c.l.b16 %v111
    %v146 = vunpack.c.h.b16 %v111
    %v147 = vunpack.c.l.b16 %v112
    %v148 = vunpack.c.h.b16 %v112
    %v149 = vunpack.c.l.b16 %v113
    %v150 = vunpack.c.h.b16 %v113
    %v151 = vunpack.c.l.b16 %v114
    %v152 = vunpack.c.h.b16 %v114
    %v153 = vunpack.c.l.b16 %v115
    %v154 = vunpack.c.h.b16 %v115
    %v155 = vunpack.c.l.b16 %v116
    %v156 = vunpack.c.h.b16 %v116
    %v157 = vpack.c.b16 %v141, %v137
    %v158 = vpack.c.b16 %v142, %v138
    %v159 = vpack.c.b16 %v143, %v139
    %v160 = vpack.c.b16 %v144, %v140
    %v161 = vpack.c.b16 %v149, %v145
    %v162 = vpack.c.b16 %v150, %v146
    %v163 = vpack.c.b16 %v151, %v147
    %v164 = vpack.c.b16 %v152, %v148
    %v165 = vpack.c.b16 %v153, %v153
    %v166 = vpack.c.b16 %v154, %v154
    %v167 = vpack.c.b16 %v155, %v155
    %v168 = vpack.c.b16 %v156, %v156
    %vm177 = vcmask 326656
    %v179 = vsel %vm177, %v106, 0
    %vm181 = vcmask 1043456
    %v183 = vsel %vm181, %v165, 0
    %v186 = vsel %vm181, %v166, 0
    %v189 = vsel %vm181, %v167, 0
    %v192 = vsel %vm181, %v168, 0
    %194 = vmatpush.bf16.msra.mxu0 0
    %195 = vmatpush.bf16.msra.mxu0 0
    %196 = vmatpush.bf16.msra.mxu0 0
    %197 = vmatpush.bf16.msra.mxu0 0
    %198 = vmatpush.bf16.msra.mxu0 0
    %199 = vmatpush.bf16.msra.mxu0 %v183
    %200 = vmatpush.bf16.msra.mxu0 %v161
    %201 = vmatpush.bf16.msra.mxu0 %v157
    %202 = vmatmul.bf16.gmra.mxu0 %v179
    %v203 = vpop.f32.mrf.mxu0
    %v204 = vadd.f32 %v119, %v203
    %v205 = vpop.f32.mrf.mxu0
    %206 = vdwg.mxu0
    %207 = vmatpush.bf16.msra.mxu0 0
    %208 = vmatpush.bf16.msra.mxu0 0
    %209 = vmatpush.bf16.msra.mxu0 0
    %210 = vmatpush.bf16.msra.mxu0 0
    %211 = vmatpush.bf16.msra.mxu0 0
    %212 = vmatpush.bf16.msra.mxu0 %v186
    %213 = vmatpush.bf16.msra.mxu0 %v162
    %214 = vmatpush.bf16.msra.mxu0 %v158
    %215 = vmatmul.bf16.gmra.mxu0 %v179
    %v216 = vpop.f32.mrf.mxu0
    %v217 = vadd.f32 %v120, %v216
    %v218 = vpop.f32.mrf.mxu0
    %219 = vdwg.mxu0
    %220 = vmatpush.bf16.msra.mxu0 0
    %221 = vmatpush.bf16.msra.mxu0 0
    %222 = vmatpush.bf16.msra.mxu0 0
    %223 = vmatpush.bf16.msra.mxu0 0
    %224 = vmatpush.bf16.msra.mxu0 0
    %225 = vmatpush.bf16.msra.mxu0 %v189
    %226 = vmatpush.bf16.msra.mxu0 %v163
    %227 = vmatpush.bf16.msra.mxu0 %v159
    %228 = vmatmul.bf16.gmra.mxu0 %v179
    %v229 = vpop.f32.mrf.mxu0
    %v230 = vadd.f32 %v121, %v229
    %v231 = vpop.f32.mrf.mxu0
    %232 = vdwg.mxu0
    %233 = vmatpush.bf16.msra.mxu0 0
    %234 = vmatpush.bf16.msra.mxu0 0
    %235 = vmatpush.bf16.msra.mxu0 0
    %236 = vmatpush.bf16.msra.mxu0 0
    %237 = vmatpush.bf16.msra.mxu0 0
    %238 = vmatpush.bf16.msra.mxu0 %v192
    %239 = vmatpush.bf16.msra.mxu0 %v164
    %240 = vmatpush.bf16.msra.mxu0 %v160
    %241 = vmatmul.bf16.gmra.mxu0 %v179
    %v242 = vpop.f32.mrf.mxu0
    %v243 = vadd.f32 %v122, %v242
    %v244 = vpop.f32.mrf.mxu0
    %245 = vdwg.mxu0
    %v246 = vmax.f32 %v204, 0.0
    %v247 = vmax.f32 %v217, 0.0
    %v248 = vmax.f32 %v230, 0.0
    %v249 = vmax.f32 %v243, 0.0
    %v250 = vpack.c.bf16 %v246, %v246
    %v251 = vpack.c.bf16 %v247, %v247
    %v252 = vpack.c.bf16 %v248, %v248
    %v253 = vpack.c.bf16 %v249, %v249
    %v254 = vld [vmem:[%s3] sm:$0xff]
    %v255 = vld [vmem:[%s3 + $0x8] sm:$0xff]
    %v256 = vld [vmem:[%s3 + $0x10] sm:$0xff]
    %v257 = vld [vmem:[%s3 + $0x18] sm:$0xff]
    %v258 = vld [vmem:[%s3 + $0x20] sm:$0xff]
    %v259 = vld [vmem:[%s3 + $0x28] sm:$0xff]
    %v260 = vld [vmem:[%s3 + $0x30] sm:$0xff]
    %v261 = vld [vmem:[%s3 + $0x38] sm:$0xff]
    %v262 = vld [vmem:[%s3 + $0x40] sm:$0xff]
    %v263 = vld [vmem:[%s3 + $0x48] sm:$0xff]
    %v264 = vld [vmem:[%s3 + $0x50] sm:$0xff]
    %v265 = vld [vmem:[%s3 + $0x58] sm:$0xff]
    %v266 = vld [vmem:[%s3 + $0x60] sm:$0xff]
    %v267 = vld [vmem:[%s3 + $0x68] sm:$0xff]
    %v268 = vld [vmem:[%s3 + $0x70] sm:$0xff]
    %v269 = vld [vmem:[%s3 + $0x78] sm:$0xff]
    %v270 = vld [vmem:[%s3 + $0x80] sm:$0xff]
    %v271 = vld [vmem:[%s3 + $0x88] sm:$0xff]
    %v272 = vld [vmem:[%s3 + $0x90] sm:$0xff]
    %v273 = vld [vmem:[%s3 + $0x98] sm:$0xff]
    %v274 = vld [vmem:[%s3 + $0xa0] sm:$0xff]
    %v275 = vld [vmem:[%s3 + $0xa8] sm:$0xff]
    %v276 = vld [vmem:[%s3 + $0xb0] sm:$0xff]
    %v277 = vld [vmem:[%s3 + $0xb8] sm:$0xff]
    %v278 = vld [vmem:[%s3 + $0xc0] sm:$0xff]
    %v279 = vld [vmem:[%s3 + $0xc8] sm:$0xff]
    %v280 = vld [vmem:[%s3 + $0xd0] sm:$0xff]
    %v281 = vld [vmem:[%s3 + $0xd8] sm:$0xff]
    %v282 = vld [vmem:[%s3 + $0xe0] sm:$0xff]
    %v283 = vld [vmem:[%s3 + $0xe8] sm:$0xff]
    %v284 = vld [vmem:[%s3 + $0xf0] sm:$0xff]
    %v285 = vld [vmem:[%s3 + $0xf8] sm:$0xff]
    %v286 = vld [vmem:[%s4] sm:$0x3]
    %v288 = vperm.slane %v286, 0
    %v289 = vperm.slane %v286, 1
    %v324 = vunpack.c.l.b16 %v254
    %v325 = vunpack.c.h.b16 %v254
    %v326 = vunpack.c.l.b16 %v255
    %v327 = vunpack.c.h.b16 %v255
    %v328 = vunpack.c.l.b16 %v256
    %v329 = vunpack.c.h.b16 %v256
    %v330 = vunpack.c.l.b16 %v257
    %v331 = vunpack.c.h.b16 %v257
    %v332 = vunpack.c.l.b16 %v258
    %v333 = vunpack.c.h.b16 %v258
    %v334 = vunpack.c.l.b16 %v259
    %v335 = vunpack.c.h.b16 %v259
    %v336 = vunpack.c.l.b16 %v260
    %v337 = vunpack.c.h.b16 %v260
    %v338 = vunpack.c.l.b16 %v261
    %v339 = vunpack.c.h.b16 %v261
    %v340 = vunpack.c.l.b16 %v262
    %v341 = vunpack.c.h.b16 %v262
    %v342 = vunpack.c.l.b16 %v263
    %v343 = vunpack.c.h.b16 %v263
    %v344 = vunpack.c.l.b16 %v264
    %v345 = vunpack.c.h.b16 %v264
    %v346 = vunpack.c.l.b16 %v265
    %v347 = vunpack.c.h.b16 %v265
    %v348 = vunpack.c.l.b16 %v266
    %v349 = vunpack.c.h.b16 %v266
    %v350 = vunpack.c.l.b16 %v267
    %v351 = vunpack.c.h.b16 %v267
    %v352 = vunpack.c.l.b16 %v268
    %v353 = vunpack.c.h.b16 %v268
    %v354 = vunpack.c.l.b16 %v269
    %v355 = vunpack.c.h.b16 %v269
    %v356 = vunpack.c.l.b16 %v270
    %v357 = vunpack.c.h.b16 %v270
    %v358 = vunpack.c.l.b16 %v271
    %v359 = vunpack.c.h.b16 %v271
    %v360 = vunpack.c.l.b16 %v272
    %v361 = vunpack.c.h.b16 %v272
    %v362 = vunpack.c.l.b16 %v273
    %v363 = vunpack.c.h.b16 %v273
    %v364 = vunpack.c.l.b16 %v274
    %v365 = vunpack.c.h.b16 %v274
    %v366 = vunpack.c.l.b16 %v275
    %v367 = vunpack.c.h.b16 %v275
    %v368 = vunpack.c.l.b16 %v276
    %v369 = vunpack.c.h.b16 %v276
    %v370 = vunpack.c.l.b16 %v277
    %v371 = vunpack.c.h.b16 %v277
    %v372 = vunpack.c.l.b16 %v278
    %v373 = vunpack.c.h.b16 %v278
    %v374 = vunpack.c.l.b16 %v279
    %v375 = vunpack.c.h.b16 %v279
    %v376 = vunpack.c.l.b16 %v280
    %v377 = vunpack.c.h.b16 %v280
    %v378 = vunpack.c.l.b16 %v281
    %v379 = vunpack.c.h.b16 %v281
    %v380 = vunpack.c.l.b16 %v282
    %v381 = vunpack.c.h.b16 %v282
    %v382 = vunpack.c.l.b16 %v283
    %v383 = vunpack.c.h.b16 %v283
    %v384 = vunpack.c.l.b16 %v284
    %v385 = vunpack.c.h.b16 %v284
    %v386 = vunpack.c.l.b16 %v285
    %v387 = vunpack.c.h.b16 %v285
    %v388 = vpack.c.b16 %v326, %v324
    %v389 = vpack.c.b16 %v327, %v325
    %v390 = vpack.c.b16 %v330, %v328
    %v391 = vpack.c.b16 %v331, %v329
    %v392 = vpack.c.b16 %v334, %v332
    %v393 = vpack.c.b16 %v335, %v333
    %v394 = vpack.c.b16 %v338, %v336
    %v395 = vpack.c.b16 %v339, %v337
    %v396 = vpack.c.b16 %v342, %v340
    %v397 = vpack.c.b16 %v343, %v341
    %v398 = vpack.c.b16 %v346, %v344
    %v399 = vpack.c.b16 %v347, %v345
    %v400 = vpack.c.b16 %v350, %v348
    %v401 = vpack.c.b16 %v351, %v349
    %v402 = vpack.c.b16 %v354, %v352
    %v403 = vpack.c.b16 %v355, %v353
    %v404 = vpack.c.b16 %v358, %v356
    %v405 = vpack.c.b16 %v359, %v357
    %v406 = vpack.c.b16 %v362, %v360
    %v407 = vpack.c.b16 %v363, %v361
    %v408 = vpack.c.b16 %v366, %v364
    %v409 = vpack.c.b16 %v367, %v365
    %v410 = vpack.c.b16 %v370, %v368
    %v411 = vpack.c.b16 %v371, %v369
    %v412 = vpack.c.b16 %v374, %v372
    %v413 = vpack.c.b16 %v375, %v373
    %v414 = vpack.c.b16 %v378, %v376
    %v415 = vpack.c.b16 %v379, %v377
    %v416 = vpack.c.b16 %v382, %v380
    %v417 = vpack.c.b16 %v383, %v381
    %v418 = vpack.c.b16 %v386, %v384
    %v419 = vpack.c.b16 %v387, %v385
    %452 = vmatpush.bf16.msra.mxu0 %v402
    %453 = vmatpush.bf16.msra.mxu0 %v400
    %454 = vmatpush.bf16.msra.mxu0 %v398
    %455 = vmatpush.bf16.msra.mxu0 %v396
    %456 = vmatpush.bf16.msra.mxu0 %v394
    %457 = vmatpush.bf16.msra.mxu0 %v392
    %458 = vmatpush.bf16.msra.mxu0 %v390
    %459 = vmatpush.bf16.msra.mxu0 %v388
    %460 = vmatmul.bf16.gmra.mxu0 %v250
    %v461 = vpop.f32.mrf.mxu0
    %v462 = vadd.f32 %v288, %v461
    %v463 = vpop.f32.mrf.mxu0
    %464 = vdwg.mxu0
    %465 = vmatpush.bf16.msra.mxu0 %v418
    %466 = vmatpush.bf16.msra.mxu0 %v416
    %467 = vmatpush.bf16.msra.mxu0 %v414
    %468 = vmatpush.bf16.msra.mxu0 %v412
    %469 = vmatpush.bf16.msra.mxu0 %v410
    %470 = vmatpush.bf16.msra.mxu0 %v408
    %471 = vmatpush.bf16.msra.mxu0 %v406
    %472 = vmatpush.bf16.msra.mxu0 %v404
    %473 = vmatmul.bf16.gmra.mxu0 %v251
    %v474 = vpop.f32.mrf.mxu0
    %v475 = vadd.f32 %v462, %v474
    %v476 = vpop.f32.mrf.mxu0
    %477 = vdwg.mxu0
    %478 = vmatpush.bf16.msra.mxu0 %v403
    %479 = vmatpush.bf16.msra.mxu0 %v401
    %480 = vmatpush.bf16.msra.mxu0 %v399
    %481 = vmatpush.bf16.msra.mxu0 %v397
    %482 = vmatpush.bf16.msra.mxu0 %v395
    %483 = vmatpush.bf16.msra.mxu0 %v393
    %484 = vmatpush.bf16.msra.mxu0 %v391
    %485 = vmatpush.bf16.msra.mxu0 %v389
    %486 = vmatmul.bf16.gmra.mxu0 %v250
    %v487 = vpop.f32.mrf.mxu0
    %v488 = vadd.f32 %v289, %v487
    %v489 = vpop.f32.mrf.mxu0
    %490 = vdwg.mxu0
    %491 = vmatpush.bf16.msra.mxu0 %v419
    %492 = vmatpush.bf16.msra.mxu0 %v417
    %493 = vmatpush.bf16.msra.mxu0 %v415
    %494 = vmatpush.bf16.msra.mxu0 %v413
    %495 = vmatpush.bf16.msra.mxu0 %v411
    %496 = vmatpush.bf16.msra.mxu0 %v409
    %497 = vmatpush.bf16.msra.mxu0 %v407
    %498 = vmatpush.bf16.msra.mxu0 %v405
    %499 = vmatmul.bf16.gmra.mxu0 %v251
    %v500 = vpop.f32.mrf.mxu0
    %v501 = vadd.f32 %v488, %v500
    %v502 = vpop.f32.mrf.mxu0
    %503 = vdwg.mxu0
    %v504 = vmax.f32 %v475, 0.0
    %v505 = vmax.f32 %v501, 0.0
    %v506 = vld [vmem:[#allocation6] sm:$0xff]
    %v507 = vld [vmem:[#allocation6 + $0x8] sm:$0xff]
    %v508 = vld [vmem:[#allocation6 + $0x10] sm:$0xff]
    %v509 = vld [vmem:[#allocation6 + $0x18] sm:$0xff]
    %v510 = vld [vmem:[#allocation6 + $0x20] sm:$0xff]
    %v511 = vld [vmem:[#allocation6 + $0x28] sm:$0xff]
    %v512 = vld [vmem:[#allocation6 + $0x30] sm:$0xff]
    %v513 = vld [vmem:[#allocation6 + $0x38] sm:$0xff]
    %v514 = vld [vmem:[#allocation6 + $0x40] sm:$0xff]
    %v515 = vld [vmem:[#allocation6 + $0x48] sm:$0xff]
    %v516 = vld [vmem:[#allocation6 + $0x50] sm:$0xff]
    %v517 = vld [vmem:[#allocation6 + $0x58] sm:$0xff]
    %v518 = vld [vmem:[#allocation6 + $0x60] sm:$0xff]
    %v519 = vld [vmem:[#allocation6 + $0x68] sm:$0xff]
    %v520 = vld [vmem:[#allocation6 + $0x70] sm:$0xff]
    %v521 = vld [vmem:[#allocation6 + $0x78] sm:$0xff]
    %v522 = vld [vmem:[#allocation6 + $0x80] sm:$0xff]
    %v523 = vld [vmem:[#allocation6 + $0x88] sm:$0xff]
    %v524 = vld [vmem:[#allocation6 + $0x90] sm:$0xff]
    %v525 = vld [vmem:[#allocation6 + $0x98] sm:$0xff]
    %v526 = vld [vmem:[#allocation6 + $0xa0] sm:$0xff]
    %v527 = vld [vmem:[#allocation6 + $0xa8] sm:$0xff]
    %v528 = vld [vmem:[#allocation6 + $0xb0] sm:$0xff]
    %v529 = vld [vmem:[#allocation6 + $0xb8] sm:$0xff]
    %v530 = vld [vmem:[#allocation6 + $0xc0] sm:$0xff]
    %v531 = vld [vmem:[#allocation6 + $0xc8] sm:$0xff]
    %v532 = vld [vmem:[#allocation6 + $0xd0] sm:$0xff]
    %v533 = vld [vmem:[#allocation6 + $0xd8] sm:$0xff]
    %v534 = vld [vmem:[#allocation6 + $0xe0] sm:$0xff]
    %v535 = vld [vmem:[#allocation6 + $0xe8] sm:$0xff]
    %v536 = vld [vmem:[#allocation6 + $0xf0] sm:$0xff]
    %v537 = vld [vmem:[#allocation6 + $0xf8] sm:$0xff]
    %v538 = vld [vmem:[#allocation7] sm:$0x3]
    %v540 = vperm.slane %v538, 0
    %v541 = vperm.slane %v538, 1
    %v576 = vunpack.c.l.b16 %v506
    %v577 = vunpack.c.h.b16 %v506
    %v578 = vunpack.c.l.b16 %v507
    %v579 = vunpack.c.h.b16 %v507
    %v580 = vunpack.c.l.b16 %v508
    %v581 = vunpack.c.h.b16 %v508
    %v582 = vunpack.c.l.b16 %v509
    %v583 = vunpack.c.h.b16 %v509
    %v584 = vunpack.c.l.b16 %v510
    %v585 = vunpack.c.h.b16 %v510
    %v586 = vunpack.c.l.b16 %v511
    %v587 = vunpack.c.h.b16 %v511
    %v588 = vunpack.c.l.b16 %v512
    %v589 = vunpack.c.h.b16 %v512
    %v590 = vunpack.c.l.b16 %v513
    %v591 = vunpack.c.h.b16 %v513
    %v592 = vunpack.c.l.b16 %v514
    %v593 = vunpack.c.h.b16 %v514
    %v594 = vunpack.c.l.b16 %v515
    %v595 = vunpack.c.h.b16 %v515
    %v596 = vunpack.c.l.b16 %v516
    %v597 = vunpack.c.h.b16 %v516
    %v598 = vunpack.c.l.b16 %v517
    %v599 = vunpack.c.h.b16 %v517
    %v600 = vunpack.c.l.b16 %v518
    %v601 = vunpack.c.h.b16 %v518
    %v602 = vunpack.c.l.b16 %v519
    %v603 = vunpack.c.h.b16 %v519
    %v604 = vunpack.c.l.b16 %v520
    %v605 = vunpack.c.h.b16 %v520
    %v606 = vunpack.c.l.b16 %v521
    %v607 = vunpack.c.h.b16 %v521
    %v608 = vunpack.c.l.b16 %v522
    %v609 = vunpack.c.h.b16 %v522
    %v610 = vunpack.c.l.b16 %v523
    %v611 = vunpack.c.h.b16 %v523
    %v612 = vunpack.c.l.b16 %v524
    %v613 = vunpack.c.h.b16 %v524
    %v614 = vunpack.c.l.b16 %v525
    %v615 = vunpack.c.h.b16 %v525
    %v616 = vunpack.c.l.b16 %v526
    %v617 = vunpack.c.h.b16 %v526
    %v618 = vunpack.c.l.b16 %v527
    %v619 = vunpack.c.h.b16 %v527
    %v620 = vunpack.c.l.b16 %v528
    %v621 = vunpack.c.h.b16 %v528
    %v622 = vunpack.c.l.b16 %v529
    %v623 = vunpack.c.h.b16 %v529
    %v624 = vunpack.c.l.b16 %v530
    %v625 = vunpack.c.h.b16 %v530
    %v626 = vunpack.c.l.b16 %v531
    %v627 = vunpack.c.h.b16 %v531
    %v628 = vunpack.c.l.b16 %v532
    %v629 = vunpack.c.h.b16 %v532
    %v630 = vunpack.c.l.b16 %v533
    %v631 = vunpack.c.h.b16 %v533
    %v632 = vunpack.c.l.b16 %v534
    %v633 = vunpack.c.h.b16 %v534
    %v634 = vunpack.c.l.b16 %v535
    %v635 = vunpack.c.h.b16 %v535
    %v636 = vunpack.c.l.b16 %v536
    %v637 = vunpack.c.h.b16 %v536
    %v638 = vunpack.c.l.b16 %v537
    %v639 = vunpack.c.h.b16 %v537
    %v640 = vpack.c.b16 %v578, %v576
    %v641 = vpack.c.b16 %v579, %v577
    %v642 = vpack.c.b16 %v582, %v580
    %v643 = vpack.c.b16 %v583, %v581
    %v644 = vpack.c.b16 %v586, %v584
    %v645 = vpack.c.b16 %v587, %v585
    %v646 = vpack.c.b16 %v590, %v588
    %v647 = vpack.c.b16 %v591, %v589
    %v648 = vpack.c.b16 %v594, %v592
    %v649 = vpack.c.b16 %v595, %v593
    %v650 = vpack.c.b16 %v598, %v596
    %v651 = vpack.c.b16 %v599, %v597
    %v652 = vpack.c.b16 %v602, %v600
    %v653 = vpack.c.b16 %v603, %v601
    %v654 = vpack.c.b16 %v606, %v604
    %v655 = vpack.c.b16 %v607, %v605
    %v656 = vpack.c.b16 %v610, %v608
    %v657 = vpack.c.b16 %v611, %v609
    %v658 = vpack.c.b16 %v614, %v612
    %v659 = vpack.c.b16 %v615, %v613
    %v660 = vpack.c.b16 %v618, %v616
    %v661 = vpack.c.b16 %v619, %v617
    %v662 = vpack.c.b16 %v622, %v620
    %v663 = vpack.c.b16 %v623, %v621
    %v664 = vpack.c.b16 %v626, %v624
    %v665 = vpack.c.b16 %v627, %v625
    %v666 = vpack.c.b16 %v630, %v628
    %v667 = vpack.c.b16 %v631, %v629
    %v668 = vpack.c.b16 %v634, %v632
    %v669 = vpack.c.b16 %v635, %v633
    %v670 = vpack.c.b16 %v638, %v636
    %v671 = vpack.c.b16 %v639, %v637
    %704 = vmatpush.bf16.msra.mxu0 %v654
    %705 = vmatpush.bf16.msra.mxu0 %v652
    %706 = vmatpush.bf16.msra.mxu0 %v650
    %707 = vmatpush.bf16.msra.mxu0 %v648
    %708 = vmatpush.bf16.msra.mxu0 %v646
    %709 = vmatpush.bf16.msra.mxu0 %v644
    %710 = vmatpush.bf16.msra.mxu0 %v642
    %711 = vmatpush.bf16.msra.mxu0 %v640
    %712 = vmatmul.bf16.gmra.mxu0 %v252
    %v713 = vpop.f32.mrf.mxu0
    %v714 = vadd.f32 %v540, %v713
    %v715 = vpop.f32.mrf.mxu0
    %716 = vdwg.mxu0
    %717 = vmatpush.bf16.msra.mxu0 %v670
    %718 = vmatpush.bf16.msra.mxu0 %v668
    %719 = vmatpush.bf16.msra.mxu0 %v666
    %720 = vmatpush.bf16.msra.mxu0 %v664
    %721 = vmatpush.bf16.msra.mxu0 %v662
    %722 = vmatpush.bf16.msra.mxu0 %v660
    %723 = vmatpush.bf16.msra.mxu0 %v658
    %724 = vmatpush.bf16.msra.mxu0 %v656
    %725 = vmatmul.bf16.gmra.mxu0 %v253
    %v726 = vpop.f32.mrf.mxu0
    %v727 = vadd.f32 %v714, %v726
    %v728 = vpop.f32.mrf.mxu0
    %729 = vdwg.mxu0
    %730 = vmatpush.bf16.msra.mxu0 %v655
    %731 = vmatpush.bf16.msra.mxu0 %v653
    %732 = vmatpush.bf16.msra.mxu0 %v651
    %733 = vmatpush.bf16.msra.mxu0 %v649
    %734 = vmatpush.bf16.msra.mxu0 %v647
    %735 = vmatpush.bf16.msra.mxu0 %v645
    %736 = vmatpush.bf16.msra.mxu0 %v643
    %737 = vmatpush.bf16.msra.mxu0 %v641
    %738 = vmatmul.bf16.gmra.mxu0 %v252
    %v739 = vpop.f32.mrf.mxu0
    %v740 = vadd.f32 %v541, %v739
    %v741 = vpop.f32.mrf.mxu0
    %742 = vdwg.mxu0
    %743 = vmatpush.bf16.msra.mxu0 %v671
    %744 = vmatpush.bf16.msra.mxu0 %v669
    %745 = vmatpush.bf16.msra.mxu0 %v667
    %746 = vmatpush.bf16.msra.mxu0 %v665
    %747 = vmatpush.bf16.msra.mxu0 %v663
    %748 = vmatpush.bf16.msra.mxu0 %v661
    %749 = vmatpush.bf16.msra.mxu0 %v659
    %750 = vmatpush.bf16.msra.mxu0 %v657
    %751 = vmatmul.bf16.gmra.mxu0 %v253
    %v752 = vpop.f32.mrf.mxu0
    %v753 = vadd.f32 %v740, %v752
    %v754 = vpop.f32.mrf.mxu0
    %755 = vdwg.mxu0
    %v756 = vmax.f32 %v727, 0.0
    %v757 = vmax.f32 %v753, 0.0
    %v758 = vpack.c.bf16 %v504, %v504
    %v759 = vpack.c.bf16 %v505, %v505
    %v760 = vpack.c.bf16 %v756, %v756
    %v761 = vpack.c.bf16 %v757, %v757
    %v762 = vld [vmem:[%s7] sm:$0xf]
    %v763 = vld [vmem:[%s7 + $0x4] sm:$0xf]
    %v764 = vld [vmem:[%s7 + $0x8] sm:$0xf]
    %v765 = vld [vmem:[%s7 + $0xc] sm:$0xf]
    %v766 = vld [vmem:[%s7 + $0x10] sm:$0xf]
    %v767 = vld [vmem:[%s7 + $0x14] sm:$0xf]
    %v768 = vld [vmem:[%s7 + $0x18] sm:$0xf]
    %v769 = vld [vmem:[%s7 + $0x1c] sm:$0xf]
    %v770 = vld [vmem:[%s7 + $0x20] sm:$0xf]
    %v771 = vld [vmem:[%s7 + $0x24] sm:$0xf]
    %v772 = vld [vmem:[%s7 + $0x28] sm:$0xf]
    %v773 = vld [vmem:[%s7 + $0x2c] sm:$0xf]
    %v774 = vld [vmem:[%s7 + $0x30] sm:$0xf]
    %v775 = vld [vmem:[%s7 + $0x34] sm:$0xf]
    %v776 = vld [vmem:[%s7 + $0x38] sm:$0xf]
    %v777 = vld [vmem:[%s7 + $0x3c] sm:$0xf]
    %v778 = vld [vmem:[%s7 + $0x40] sm:$0xf]
    %v779 = vld [vmem:[%s7 + $0x44] sm:$0xf]
    %v780 = vld [vmem:[%s7 + $0x48] sm:$0xf]
    %v781 = vld [vmem:[%s7 + $0x4c] sm:$0xf]
    %v782 = vld [vmem:[%s7 + $0x50] sm:$0xf]
    %v783 = vld [vmem:[%s7 + $0x54] sm:$0xf]
    %v784 = vld [vmem:[%s7 + $0x58] sm:$0xf]
    %v785 = vld [vmem:[%s7 + $0x5c] sm:$0xf]
    %v786 = vld [vmem:[%s7 + $0x60] sm:$0xf]
    %v787 = vld [vmem:[%s7 + $0x64] sm:$0xf]
    %v788 = vld [vmem:[%s7 + $0x68] sm:$0xf]
    %v789 = vld [vmem:[%s7 + $0x6c] sm:$0xf]
    %v790 = vld [vmem:[%s7 + $0x70] sm:$0xf]
    %v791 = vld [vmem:[%s7 + $0x74] sm:$0xf]
    %v792 = vld [vmem:[%s7 + $0x78] sm:$0xf]
    %v793 = vld [vmem:[%s7 + $0x7c] sm:$0xf]
    %v794 = vld [vmem:[%s7 + $0x80] sm:$0xf]
    %v795 = vld [vmem:[%s7 + $0x84] sm:$0xf]
    %v796 = vld [vmem:[%s7 + $0x88] sm:$0xf]
    %v797 = vld [vmem:[%s7 + $0x8c] sm:$0xf]
    %v798 = vld [vmem:[%s7 + $0x90] sm:$0xf]
    %v799 = vld [vmem:[%s7 + $0x94] sm:$0xf]
    %v800 = vld [vmem:[%s7 + $0x98] sm:$0xf]
    %v801 = vld [vmem:[%s7 + $0x9c] sm:$0xf]
    %v802 = vld [vmem:[%s7 + $0xa0] sm:$0xf]
    %v803 = vld [vmem:[%s7 + $0xa4] sm:$0xf]
    %v804 = vld [vmem:[%s7 + $0xa8] sm:$0xf]
    %v805 = vld [vmem:[%s7 + $0xac] sm:$0xf]
    %v806 = vld [vmem:[%s7 + $0xb0] sm:$0xf]
    %v807 = vld [vmem:[%s7 + $0xb4] sm:$0xf]
    %v808 = vld [vmem:[%s7 + $0xb8] sm:$0xf]
    %v809 = vld [vmem:[%s7 + $0xbc] sm:$0xf]
    %v810 = vld [vmem:[%s7 + $0xc0] sm:$0xf]
    %v811 = vld [vmem:[%s7 + $0xc4] sm:$0xf]
    %v812 = vld [vmem:[%s7 + $0xc8] sm:$0xf]
    %v813 = vld [vmem:[%s7 + $0xcc] sm:$0xf]
    %v814 = vld [vmem:[%s7 + $0xd0] sm:$0xf]
    %v815 = vld [vmem:[%s7 + $0xd4] sm:$0xf]
    %v816 = vld [vmem:[%s7 + $0xd8] sm:$0xf]
    %v817 = vld [vmem:[%s7 + $0xdc] sm:$0xf]
    %v818 = vld [vmem:[%s7 + $0xe0] sm:$0xf]
    %v819 = vld [vmem:[%s7 + $0xe4] sm:$0xf]
    %v820 = vld [vmem:[%s7 + $0xe8] sm:$0xf]
    %v821 = vld [vmem:[%s7 + $0xec] sm:$0xf]
    %v822 = vld [vmem:[%s7 + $0xf0] sm:$0xf]
    %v823 = vld [vmem:[%s7 + $0xf4] sm:$0xf]
    %v824 = vld [vmem:[%s7 + $0xf8] sm:$0xf]
    %v825 = vld [vmem:[%s7 + $0xfc] sm:$0xf]
    %v826 = vld [vmem:[#allocation9] sm:$0x1]
    %v828 = vperm.slane %v826, 0
    %v894 = vunpack.c.l.b16 %v762
    %v895 = vunpack.c.l.b16 %v763
    %v896 = vunpack.c.l.b16 %v764
    %v897 = vunpack.c.l.b16 %v765
    %v898 = vunpack.c.l.b16 %v766
    %v899 = vunpack.c.l.b16 %v767
    %v900 = vunpack.c.l.b16 %v768
    %v901 = vunpack.c.l.b16 %v769
    %v902 = vunpack.c.l.b16 %v770
    %v903 = vunpack.c.l.b16 %v771
    %v904 = vunpack.c.l.b16 %v772
    %v905 = vunpack.c.l.b16 %v773
    %v906 = vunpack.c.l.b16 %v774
    %v907 = vunpack.c.l.b16 %v775
    %v908 = vunpack.c.l.b16 %v776
    %v909 = vunpack.c.l.b16 %v777
    %v910 = vunpack.c.l.b16 %v778
    %v911 = vunpack.c.l.b16 %v779
    %v912 = vunpack.c.l.b16 %v780
    %v913 = vunpack.c.l.b16 %v781
    %v914 = vunpack.c.l.b16 %v782
    %v915 = vunpack.c.l.b16 %v783
    %v916 = vunpack.c.l.b16 %v784
    %v917 = vunpack.c.l.b16 %v785
    %v918 = vunpack.c.l.b16 %v786
    %v919 = vunpack.c.l.b16 %v787
    %v920 = vunpack.c.l.b16 %v788
    %v921 = vunpack.c.l.b16 %v789
    %v922 = vunpack.c.l.b16 %v790
    %v923 = vunpack.c.l.b16 %v791
    %v924 = vunpack.c.l.b16 %v792
    %v925 = vunpack.c.l.b16 %v793
    %v926 = vunpack.c.l.b16 %v794
    %v927 = vunpack.c.l.b16 %v795
    %v928 = vunpack.c.l.b16 %v796
    %v929 = vunpack.c.l.b16 %v797
    %v930 = vunpack.c.l.b16 %v798
    %v931 = vunpack.c.l.b16 %v799
    %v932 = vunpack.c.l.b16 %v800
    %v933 = vunpack.c.l.b16 %v801
    %v934 = vunpack.c.l.b16 %v802
    %v935 = vunpack.c.l.b16 %v803
    %v936 = vunpack.c.l.b16 %v804
    %v937 = vunpack.c.l.b16 %v805
    %v938 = vunpack.c.l.b16 %v806
    %v939 = vunpack.c.l.b16 %v807
    %v940 = vunpack.c.l.b16 %v808
    %v941 = vunpack.c.l.b16 %v809
    %v942 = vunpack.c.l.b16 %v810
    %v943 = vunpack.c.l.b16 %v811
    %v944 = vunpack.c.l.b16 %v812
    %v945 = vunpack.c.l.b16 %v813
    %v946 = vunpack.c.l.b16 %v814
    %v947 = vunpack.c.l.b16 %v815
    %v948 = vunpack.c.l.b16 %v816
    %v949 = vunpack.c.l.b16 %v817
    %v950 = vunpack.c.l.b16 %v818
    %v951 = vunpack.c.l.b16 %v819
    %v952 = vunpack.c.l.b16 %v820
    %v953 = vunpack.c.l.b16 %v821
    %v954 = vunpack.c.l.b16 %v822
    %v955 = vunpack.c.l.b16 %v823
    %v956 = vunpack.c.l.b16 %v824
    %v957 = vunpack.c.l.b16 %v825
    %v958 = vpack.c.b16 %v895, %v894
    %v959 = vpack.c.b16 %v897, %v896
    %v960 = vpack.c.b16 %v899, %v898
    %v961 = vpack.c.b16 %v901, %v900
    %v962 = vpack.c.b16 %v903, %v902
    %v963 = vpack.c.b16 %v905, %v904
    %v964 = vpack.c.b16 %v907, %v906
    %v965 = vpack.c.b16 %v909, %v908
    %v966 = vpack.c.b16 %v911, %v910
    %v967 = vpack.c.b16 %v913, %v912
    %v968 = vpack.c.b16 %v915, %v914
    %v969 = vpack.c.b16 %v917, %v916
    %v970 = vpack.c.b16 %v919, %v918
    %v971 = vpack.c.b16 %v921, %v920
    %v972 = vpack.c.b16 %v923, %v922
    %v973 = vpack.c.b16 %v925, %v924
    %v974 = vpack.c.b16 %v927, %v926
    %v975 = vpack.c.b16 %v929, %v928
    %v976 = vpack.c.b16 %v931, %v930
    %v977 = vpack.c.b16 %v933, %v932
    %v978 = vpack.c.b16 %v935, %v934
    %v979 = vpack.c.b16 %v937, %v936
    %v980 = vpack.c.b16 %v939, %v938
    %v981 = vpack.c.b16 %v941, %v940
    %v982 = vpack.c.b16 %v943, %v942
    %v983 = vpack.c.b16 %v945, %v944
    %v984 = vpack.c.b16 %v947, %v946
    %v985 = vpack.c.b16 %v949, %v948
    %v986 = vpack.c.b16 %v951, %v950
    %v987 = vpack.c.b16 %v953, %v952
    %v988 = vpack.c.b16 %v955, %v954
    %v989 = vpack.c.b16 %v957, %v956
    %1022 = vmatpush.bf16.msra.mxu0 %v965
    %1023 = vmatpush.bf16.msra.mxu0 %v964
    %1024 = vmatpush.bf16.msra.mxu0 %v963
    %1025 = vmatpush.bf16.msra.mxu0 %v962
    %1026 = vmatpush.bf16.msra.mxu0 %v961
    %1027 = vmatpush.bf16.msra.mxu0 %v960
    %1028 = vmatpush.bf16.msra.mxu0 %v959
    %1029 = vmatpush.bf16.msra.mxu0 %v958
    %1030 = vmatmul.bf16.gmra.mxu0 %v758
    %v1031 = vpop.f32.mrf.mxu0
    %v1032 = vadd.f32 %v828, %v1031
    %v1033 = vpop.f32.mrf.mxu0
    %1034 = vdwg.mxu0
    %1035 = vmatpush.bf16.msra.mxu0 %v973
    %1036 = vmatpush.bf16.msra.mxu0 %v972
    %1037 = vmatpush.bf16.msra.mxu0 %v971
    %1038 = vmatpush.bf16.msra.mxu0 %v970
    %1039 = vmatpush.bf16.msra.mxu0 %v969
    %1040 = vmatpush.bf16.msra.mxu0 %v968
    %1041 = vmatpush.bf16.msra.mxu0 %v967
    %1042 = vmatpush.bf16.msra.mxu0 %v966
    %1043 = vmatmul.bf16.gmra.mxu0 %v759
    %v1044 = vpop.f32.mrf.mxu0
    %v1045 = vadd.f32 %v1032, %v1044
    %v1046 = vpop.f32.mrf.mxu0
    %1047 = vdwg.mxu0
    %1048 = vmatpush.bf16.msra.mxu0 %v981
    %1049 = vmatpush.bf16.msra.mxu0 %v980
    %1050 = vmatpush.bf16.msra.mxu0 %v979
    %1051 = vmatpush.bf16.msra.mxu0 %v978
    %1052 = vmatpush.bf16.msra.mxu0 %v977
    %1053 = vmatpush.bf16.msra.mxu0 %v976
    %1054 = vmatpush.bf16.msra.mxu0 %v975
    %1055 = vmatpush.bf16.msra.mxu0 %v974
    %1056 = vmatmul.bf16.gmra.mxu0 %v760
    %v1057 = vpop.f32.mrf.mxu0
    %v1058 = vadd.f32 %v1045, %v1057
    %v1059 = vpop.f32.mrf.mxu0
    %1060 = vdwg.mxu0
    %1061 = vmatpush.bf16.msra.mxu0 %v989
    %1062 = vmatpush.bf16.msra.mxu0 %v988
    %1063 = vmatpush.bf16.msra.mxu0 %v987
    %1064 = vmatpush.bf16.msra.mxu0 %v986
    %1065 = vmatpush.bf16.msra.mxu0 %v985
    %1066 = vmatpush.bf16.msra.mxu0 %v984
    %1067 = vmatpush.bf16.msra.mxu0 %v983
    %1068 = vmatpush.bf16.msra.mxu0 %v982
    %1069 = vmatmul.bf16.gmra.mxu0 %v761
    %v1070 = vpop.f32.mrf.mxu0
    %v1071 = vadd.f32 %v1058, %v1070
    %v1072 = vpop.f32.mrf.mxu0
    %1073 = vdwg.mxu0
    %vm1074 = vcmask 15360
    %1075 = vst.msk [vmem:[%s9] sm:$0xff] %vm1074, %v1071
    // Predicated region
    $region58: #{tpu_custom_call.1} parent=1 // pred_check
      _
    $region59: #{tpu_custom_call.1} parent=1 // pred_check_branch
      %1077 = sbr.rel (0) target = $region61
    $region60: #{tpu_custom_call.1} parent=1 // pred_region
      _
    $region61: #{tpu_custom_call.1} parent=1 // pred_fallthru
      _
    // Predicated region
    $region62: #{tpu_custom_call.1} parent=1 // pred_check
      _
    $region63: #{tpu_custom_call.1} parent=1 // pred_check_branch
      %1079 = sbr.rel (0) target = $region65
    $region64: #{tpu_custom_call.1} parent=1 // pred_region
      _
    $region65: #{tpu_custom_call.1} parent=1 // pred_fallthru
      _
    %1080 = vsyncpa [#allocation3], 1
    %1081 = vsyncpa [#allocation5], 1
    %1082 = vsyncpa [#allocation8], 1

</llo_original>
